<compile_context>
chip_gen: v5e
topology: v5e:2x2
jax: 0.10.0
libtpu: 0.0.40
codegen_flags: <defaults>
</compile_context>

<pallas_src>
import functools

import jax
import jax.numpy as jnp
from jax.experimental import pallas as pl
from jax.experimental.pallas import tpu as pltpu


_LANE = 128


def _round_up(x, m):
    return (x + m - 1) // m * m


# ----------------------------- Pallas kernels ---------------------------------

def _act_kernel(x_ref, o_ref, *, mode):
    """One (C, T) tile: channels on sublanes, spatial pixels on lanes.

    x_ref : (C, T) f32
    o_ref : (C, T) f32   for float modes, (1, T) int32 for argmax
    """
    x = x_ref[...]

    if mode == "identity":
        o_ref[...] = x

    elif mode == "sigmoid":
        o_ref[...] = 1.0 / (1.0 + jnp.exp(-x))          # exp + recip on EUP

    elif mode == "softmax":
        m = jnp.max(x, axis=0, keepdims=True)           # sublane reduce (XLU)
        e = jnp.exp(x - m)
        s = jnp.sum(e, axis=0, keepdims=True)
        o_ref[...] = e / s

    elif mode == "logsoftmax":
        m = jnp.max(x, axis=0, keepdims=True)
        z = x - m
        s = jnp.sum(jnp.exp(z), axis=0, keepdims=True)
        o_ref[...] = z - jnp.log(s)

    elif mode == "argmax":
        c = x.shape[0]
        m = jnp.max(x, axis=0, keepdims=True)
        iota = jax.lax.broadcasted_iota(jnp.int32, x.shape, 0)
        # first index attaining the max (ties -> smallest index)
        idx = jnp.min(jnp.where(x == m, iota, c), axis=0, keepdims=True)
        o_ref[...] = idx

    else:
        raise ValueError(f"unknown mode {mode}")


def _run_activation(x, mode, out_dtype):
    """Apply one activation mode over channel dim of an NCHW tensor."""
    N, C, H, W = x.shape
    HW = H * W

    # Lane-dense spatial axis: pad H*W to a multiple of 128 and tile it so the
    # per-step block stays VMEM-friendly and the grid has a second parallel
    # axis (keeps both v7x TensorCores busy even at batch 1).
    tile = min(512, _round_up(HW, _LANE))
    HWp = _round_up(HW, tile)

    xf = x.reshape(N, C, HW)
    if HWp > HW:
        xf = jnp.pad(xf, ((0, 0), (0, 0), (0, HWp - HW)))

    cout = 1 if mode == "argmax" else C
    kernel = functools.partial(_act_kernel, mode=mode)

    out = pl.pallas_call(
        kernel,
        out_shape=jax.ShapeDtypeStruct((N, cout, HWp), out_dtype),
        grid=(N, HWp // tile),
        in_specs=[pl.BlockSpec((None, C, tile), lambda b, t: (b, 0, t))],
        out_specs=pl.BlockSpec((None, cout, tile), lambda b, t: (b, 0, t)),
        compiler_params=pltpu.CompilerParams(
            dimension_semantics=("parallel", "parallel")),
    )(xf)

    out = out[:, :, :HW].reshape(N, cout, H, W)
    return out


# --------------------------- Activation dispatcher -----------------------------

def activation_forward(name, x):
    """JAX/Pallas equivalent of Activation(name).forward(x) for NCHW x."""
    if name is None or name == "identity":
        return _run_activation(x, "identity", x.dtype)
    if name == "sigmoid":
        return _run_activation(x, "sigmoid", x.dtype)
    if name in ("softmax", "softmax2d"):
        # softmax2d == nn.Softmax(dim=1); plain 'softmax' in this codebase is
        # also used over channels.  (dim != 1: see TODO at top.)
        return _run_activation(x, "softmax", x.dtype)
    if name == "logsoftmax":
        return _run_activation(x, "logsoftmax", x.dtype)
    if name in ("argmax", "argmax2d"):
        out = _run_activation(x, "argmax", jnp.int32)
        return out[:, 0]                                  # drop the reduced dim
    raise ValueError(
        "Activation should be callable/sigmoid/softmax/logsoftmax/None; "
        f"got {name}")


# --------------------------- pure-JAX reference --------------------------------

def activation_forward_ref(name, x):
    if name is None or name == "identity":
        return x
    if name == "sigmoid":
        return jax.nn.sigmoid(x)
    if name in ("softmax", "softmax2d"):
        return jax.nn.softmax(x, axis=1)
    if name == "logsoftmax":
        return jax.nn.log_softmax(x, axis=1)
    if name in ("argmax", "argmax2d"):
        return jnp.argmax(x, axis=1).astype(jnp.int32)
    raise ValueError(name)


# ----------------------------------- main --------------------------------------

if __name__ == "__main__":
    key = jax.random.PRNGKey(0)
    x = jax.random.normal(key, (2, 4, 16, 16), jnp.float32)   # NCHW

    fwd = jax.jit(activation_forward, static_argnums=0)

    for nm in ["identity", "sigmoid", "softmax2d", "softmax",
               "logsoftmax", "argmax2d"]:
        out = jax.block_until_ready(fwd(nm, x))
        ref = jax.block_until_ready(activation_forward_ref(nm, x))
        assert out.shape == ref.shape, (nm, out.shape, ref.shape)
        assert out.dtype == ref.dtype, (nm, out.dtype, ref.dtype)
        if nm.startswith("argmax"):
            assert bool(jnp.all(out == ref)), nm
        else:
            err = float(jnp.max(jnp.abs(out - ref)))
            assert err < 1e-5, (nm, err)                      # f32-tight check
        assert bool(jnp.all(jnp.isfinite(out.astype(jnp.float32)))), nm

    print("KERNEL_OK")
</pallas_src>

<mosaic_0001>
module attributes {stable_mosaic.version = 11 : i64} {
  func.func @_act_kernel(%arg0: i32, %arg1: i32, %arg2: memref<1x4x256xf32, #tpu.memory_space<vmem>>, %arg3: memref<1x4x256xf32, #tpu.memory_space<vmem>>) attributes {dimension_semantics = [#tpu.dimension_semantics<parallel>, #tpu.dimension_semantics<parallel>], iteration_bounds = array<i64: 2, 1>, scalar_prefetch = 0 : i64, scratch_operands = 0 : i64, tpu.core_type = #tpu.core_type<tc>, window_params = [{transform_indices = @transform_0, window_bounds = array<i64: 1, 4, 256>}, {transform_indices = @transform_1, window_bounds = array<i64: 1, 4, 256>}]} {
    %c0 = arith.constant 0 : index
    %c0_0 = arith.constant 0 : index
    %c0_1 = arith.constant 0 : index
    %0 = vector.load %arg2[%c0, %c0_0, %c0_1] : memref<1x4x256xf32, #tpu.memory_space<vmem>>, vector<1x4x256xf32>
    %1 = vector.shape_cast %0 : vector<1x4x256xf32> to vector<4x256xf32>
    %c0_2 = arith.constant 0 : index
    %c0_3 = arith.constant 0 : index
    %c0_4 = arith.constant 0 : index
    %2 = vector.load %arg3[%c0_2, %c0_3, %c0_4] : memref<1x4x256xf32, #tpu.memory_space<vmem>>, vector<1x4x256xf32>
    %3 = vector.shape_cast %2 : vector<1x4x256xf32> to vector<4x256xf32>
    %4 = vector.shape_cast %1 : vector<4x256xf32> to vector<1x4x256xf32>
    tpu.vector_store %arg3[%c0_2, %c0_3, %c0_4], %4 {strides = array<i32>} : memref<1x4x256xf32, #tpu.memory_space<vmem>>, vector<1x4x256xf32>,
    return
  }
  func.func @transform_0(%arg0: i32, %arg1: i32) -> (i32, i32, i32) {
    %c0_i32 = arith.constant 0 : i32
    %c0_i32_0 = arith.constant 0 : i32
    return %arg0, %c0_i32, %arg1 : i32, i32, i32
  }
  func.func @transform_1(%arg0: i32, %arg1: i32) -> (i32, i32, i32) {
    %c0_i32 = arith.constant 0 : i32
    %c0_i32_0 = arith.constant 0 : i32
    return %arg0, %c0_i32, %arg1 : i32, i32, i32
  }
}

</mosaic_0001>

<llo_original>
// kernel: activation_forward.1
$region0: #{activation_forward.1}
  #allocation0 [shape = 'u32[]', space=smem, size = 0x4, offset = 0x4, fixed_abs, tag = 'smem constant byte address 0x4 - core index']
  #allocation1 [shape = 'u32[72,128]{1,0:T(1,128)}', space=vmem, size = 0x9000, scoped, tag = 'internal scratch']
  %s0 = inlined_call_operand.vmem [shape: f32[2,4,256], index: 0, kind: input, shape index: {}]
  %s1 = inlined_call_operand.vmem [shape: f32[2,4,256], index: 1, kind: output, shape index: {}]
  %s2 = sld [smem:[#allocation0]]
  $region37: #{activation_forward.1} parent=0
    _
  %s4 = ssub.s32 1, %s2
  %s5 = scalar_select 0, %s4, %s2
  loop: start=0, step=1, limit=4
  $region2: #{activation_forward.1} parent=0 // loop_pre_header
    _
  $region3: #{activation_forward.1} parent=0 // loop_header
    %s7 = sphi 0, %s11
    %p8 = scmp.ge.s32.totalorder %s7, 4
    %s14 = sphi 0, %s26
    %s15 = sphi 0, %s22
    %s16 = sphi 0, %s14
    %s17 = sphi 0, %s15
    %s18 = sphi 0, %s16
    %s19 = sphi 0, %s17
    %s31 = sphi 0, %s33
    %s34 = sphi 0, %s31
    %s35 = sphi 0, %s34
    %s51 = sphi 0, %s35
    %s59 = sphi 0, %s61
    %s62 = sphi 0, %s59
    %s63 = sphi 0, %s62
    %s79 = sphi 0, %s63
  $region4: #{activation_forward.1} parent=0 // loop_header_branch
    %10 = sbr.rel (%p8) target = $region8
  $region5: #{activation_forward.1} parent=0 // loop_body
    %s12 = ssub.s32 %s7, 1
    %s13 = ssub.s32 %s7, 2
    %s20 = sadd.s32 1, %s15
    %p21 = scmp.ge.s32.totalorder %s20, 1
    %s22 = scalar_select %p21, 0, %s20
    %s23 = sadd.s32 1, %s14
    %s24 = scalar_select %p21, %s23, %s14
    %p25 = scmp.ge.s32.totalorder %s24, 2
    %s26 = scalar_select %p25, 0, %s24
    %s27 = ssub.s32 %s14, %s26
    %s28 = ssub.s32 %s15, %s22
    %s29 = sor.u32 %s27, %s28
    %p30 = scmp.eq.s32.totalorder %s29, 0
    %s32 = sadd.s32 %s31, 1
    %s33 = scalar_select %p30, %s31, %s32
    %p36 = pneg %p30
    %p37 = scmp.eq.s32.totalorder %s7, 1
    %p38 = por %p36, %p37
    %p39 = scmp.ne.s32.totalorder %s31, %s34
    %p40 = scmp.eq.s32.totalorder %s7, 0
    %p41 = por %p39, %p40
    %p42 = scmp.ne.s32.totalorder %s31, %s34
    %p43 = scmp.eq.s32.totalorder %s12, 1
    %p44 = por %p42, %p43
    %p45 = scmp.ne.s32.totalorder %s34, %s35
    %p46 = scmp.eq.s32.totalorder %s12, 0
    %p47 = por %p45, %p46
    %p48 = scmp.ne.s32.totalorder %s34, %s35
    %p49 = scmp.eq.s32.totalorder %s13, 1
    %p50 = por %p48, %p49
    %p52 = scmp.ne.s32.totalorder %s35, %s51
    %p53 = scmp.eq.s32.totalorder %s13, 0
    %p54 = por %p52, %p53
    %s55 = ssub.s32 %s14, %s26
    %s56 = ssub.s32 %s15, %s22
    %s57 = sor.u32 %s55, %s56
    %p58 = scmp.eq.s32.totalorder %s57, 0
    %s60 = sadd.s32 %s59, 1
    %s61 = scalar_select %p58, %s59, %s60
    %p64 = pneg %p58
    %p65 = scmp.eq.s32.totalorder %s7, 1
    %p66 = por %p64, %p65
    %p67 = scmp.ne.s32.totalorder %s59, %s62
    %p68 = scmp.eq.s32.totalorder %s7, 0
    %p69 = por %p67, %p68
    %p70 = scmp.ne.s32.totalorder %s59, %s62
    %p71 = scmp.eq.s32.totalorder %s12, 1
    %p72 = por %p70, %p71
    %p73 = scmp.ne.s32.totalorder %s62, %s63
    %p74 = scmp.eq.s32.totalorder %s12, 0
    %p75 = por %p73, %p74
    %p76 = scmp.ne.s32.totalorder %s62, %s63
    %p77 = scmp.eq.s32.totalorder %s13, 1
    %p78 = por %p76, %p77
    %p80 = scmp.ne.s32.totalorder %s63, %s79
    %p81 = scmp.eq.s32.totalorder %s13, 0
    %p82 = por %p80, %p81
    %p83 = scmp.le.s32.totalorder 1, %s7
    %p84 = scmp.lt.s32.totalorder %s7, 3
    %p85 = pnand %p83, %p84
    %p86 = pneg %p85
    // Predicated region
    $region9: #{activation_forward.1} parent=5 // pred_check
      _
    $region10: #{activation_forward.1} parent=5 // pred_check_branch
      %88 = sbr.rel (%p85) target = $region12
    $region11: #{activation_forward.1} parent=5 // pred_region
      %s89 = ssub.s32 %s7, 1
    $region12: #{activation_forward.1} parent=5 // pred_fallthru
      _
    %p90 = scmp.lt.s32.totalorder %s7, 2
    // Predicated region
    $region13: #{activation_forward.1} parent=5 // pred_check
      %p91 = pneg %p90
    $region14: #{activation_forward.1} parent=5 // pred_check_branch
      %93 = sbr.rel (%p91) target = $region16
    $region15: #{activation_forward.1} parent=5 // pred_region
      // Predicated region
      $region17: #{activation_forward.1} parent=15 // pred_check
        %p94 = pneg %p41
      $region18: #{activation_forward.1} parent=15 // pred_check_branch
        %96 = sbr.rel (%p94) target = $region20
      $region19: #{activation_forward.1} parent=15 // pred_region
        %s97 = smul.u32 2, %s15
        %p98 = scmp.lt.s32.totalorder %s14, 1
        %s99 = scalar_select %p98, %s14, 1
        %p100 = scmp.lt.s32.totalorder %s97, 1
        %s101 = scalar_select %p100, %s97, 1
        %s102 = smul.addr %s99, 2
        %s103 = sadd.s32 %s101, %s102
        %s104 = smul.addr %s103, 4
        %s105 = scalar_lea.vmem %s0, %s104
        %s106 = smul.u32 2, %s15
      $region20: #{activation_forward.1} parent=15 // pred_fallthru
        _
    $region16: #{activation_forward.1} parent=5 // pred_fallthru
      _
    %p107 = scmp.le.s32.totalorder 1, %s7
    %p108 = scmp.lt.s32.totalorder %s7, 3
    %p109 = pnand %p107, %p108
    %p110 = pneg %p109
    // Predicated region
    $region21: #{activation_forward.1} parent=5 // pred_check
      _
    $region22: #{activation_forward.1} parent=5 // pred_check_branch
      %112 = sbr.rel (%p109) target = $region24
    $region23: #{activation_forward.1} parent=5 // pred_region
      %s113 = ssub.s32 %s7, 1
      %s114 = smul.u32 2, %s17
      %p115 = scmp.lt.s32.totalorder %s16, 1
      %s116 = scalar_select %p115, %s16, 1
      %p117 = scmp.lt.s32.totalorder %s114, 1
      %s118 = scalar_select %p117, %s114, 1
      %s119 = smul.addr %s116, 2
      %s120 = sadd.s32 %s118, %s119
      %s121 = smul.addr %s120, 4
      %s122 = scalar_lea.vmem %s0, %s121
      %p123 = pneg %p47
      %p124 = pneg %p44
      %p125 = pneg %p75
      %p126 = pneg %p72
      %s127 = smul.u32 2, %s17
      %p128 = scmp.lt.s32.totalorder %s16, 1
      %s129 = scalar_select %p128, %s16, 1
      %p130 = scmp.lt.s32.totalorder %s127, 1
      %s131 = scalar_select %p130, %s127, 1
      %s132 = smul.addr %s129, 2
      %s133 = sadd.s32 %s131, %s132
      %s134 = smul.addr %s133, 4
      %s135 = scalar_lea.vmem %s1, %s134
      %s136 = smul.u32 2, %s17
      %p137 = scmp.lt.s32.totalorder %s16, 1
      %s138 = scalar_select %p137, %s16, 1
      %p139 = scmp.lt.s32.totalorder %s136, 1
      %s140 = scalar_select %p139, %s136, 1
      %s141 = smul.addr %s138, 2
      %s142 = sadd.s32 %s140, %s141
      %s143 = smul.addr %s142, 4
      %s144 = scalar_lea.vmem %s0, %s143
      %s145 = smul.u32 2, %s17
      %s146 = smul.u32 2, %s17
      %p147 = scmp.lt.s32.totalorder %s16, 1
      %s148 = scalar_select %p147, %s16, 1
      %p149 = scmp.lt.s32.totalorder %s146, 1
      %s150 = scalar_select %p149, %s146, 1
      %s151 = smul.addr %s148, 2
      %s152 = sadd.s32 %s150, %s151
      %s153 = smul.addr %s152, 4
      %s154 = scalar_lea.vmem %s1, %s153
      %s155 = smul.u32 2, %s17
      %v156 = vld [vmem:[%s144] sm:$0xff]
      %157 = vst [vmem:[%s154] sm:$0xff] %v156
      %s158 = smul.u32 2, %s17
      %p159 = scmp.lt.s32.totalorder %s16, 1
      %s160 = scalar_select %p159, %s16, 1
      %p161 = scmp.lt.s32.totalorder %s158, 1
      %s162 = scalar_select %p161, %s158, 1
      %s163 = smul.addr %s160, 2
      %s164 = sadd.s32 %s162, %s163
      %s165 = smul.addr %s164, 4
      %s166 = scalar_lea.vmem %s1, %s165
      // Predicated region
      $region25: #{activation_forward.1} parent=23 // pred_check
        %p167 = pneg %p72
      $region26: #{activation_forward.1} parent=23 // pred_check_branch
        %169 = sbr.rel (%p167) target = $region28
      $region27: #{activation_forward.1} parent=23 // pred_region
        %s170 = smul.u32 2, %s17
      $region28: #{activation_forward.1} parent=23 // pred_fallthru
        _
    $region24: #{activation_forward.1} parent=5 // pred_fallthru
      _
    %p171 = scmp.le.s32.totalorder 2, %s7
    // Predicated region
    $region29: #{activation_forward.1} parent=5 // pred_check
      %p172 = pneg %p171
    $region30: #{activation_forward.1} parent=5 // pred_check_branch
      %174 = sbr.rel (%p172) target = $region32
    $region31: #{activation_forward.1} parent=5 // pred_region
      %s175 = ssub.s32 %s7, 2
      // Predicated region
      $region33: #{activation_forward.1} parent=31 // pred_check
        %p176 = pneg %p78
      $region34: #{activation_forward.1} parent=31 // pred_check_branch
        %178 = sbr.rel (%p176) target = $region36
      $region35: #{activation_forward.1} parent=31 // pred_region
        %s179 = smul.u32 2, %s19
        %p180 = scmp.lt.s32.totalorder %s18, 1
        %s181 = scalar_select %p180, %s18, 1
        %p182 = scmp.lt.s32.totalorder %s179, 1
        %s183 = scalar_select %p182, %s179, 1
        %s184 = smul.addr %s181, 2
        %s185 = sadd.s32 %s183, %s184
        %s186 = smul.addr %s185, 4
        %s187 = scalar_lea.vmem %s1, %s186
      $region36: #{activation_forward.1} parent=31 // pred_fallthru
        _
    $region32: #{activation_forward.1} parent=5 // pred_fallthru
      _
  $region6: #{activation_forward.1} parent=0 // loop_footer
    %s11 = sadd.s32 1, %s7
  $region7: #{activation_forward.1} parent=0 // loop_footer_branch
    %6 = sbr.rel target = $region3
  $region8: #{activation_forward.1} parent=0 // loop_exit
    _

</llo_original>
